<compile_context>
chip_gen: v5e
topology: v5e:2x2
jax: 0.10.0
libtpu: 0.0.40
codegen_flags: <defaults>
</compile_context>

<pallas_src>
import functools

import jax
import jax.numpy as jnp
from jax.experimental import pallas as pl
from jax.experimental.pallas import tpu as pltpu

_MAX_LANE = 16384                        # cap on flattened lane width (elements)
_TARGET_BLOCK_BYTES = 2 * 1024 * 1024    # ~2 MiB per pipelined block


def _identity_kernel(x_ref, o_ref):
    # Hot path: passthrough of one lane-dense tile (full-vreg loads/stores).
    o_ref[...] = x_ref[...]


def _plan_2d(shape):
    """Pick a lane-dense (rows, lane) view of the flattened array."""
    total = 1
    for d in shape:
        total *= int(d)
    if total % 128 == 0:
        lane = 128
        while lane * 2 <= _MAX_LANE and total % (lane * 2) == 0:
            lane *= 2
    else:
        # Lane-sparse fallback (still correct): keep the original trailing dim.
        lane = int(shape[-1]) if len(shape) else 1
        lane = max(lane, 1)
    return total // lane, lane


def _row_tile(rows, lane, itemsize):
    """Row-tile sized for ~2 MiB blocks; multiple of 8 (or the full extent)."""
    tr = max(1, _TARGET_BLOCK_BYTES // max(1, lane * itemsize))
    if tr >= rows:
        return rows                      # single block over rows: full dim, legal
    tr = max(8, (tr // 8) * 8)           # sublane dim must be a multiple of 8
    return min(tr, rows)


@functools.partial(jax.jit, donate_argnums=(0,))
def video_feature_encoder_forward(x):
    """Identity forward of VideoFeatureEncoder via an in-place Pallas copy."""
    orig_shape = x.shape
    total = x.size
    if total == 0:
        return x                         # nothing to move

    rows, lane = _plan_2d(orig_shape)
    x2d = x.reshape(rows, lane)
    itemsize = jnp.dtype(x2d.dtype).itemsize
    tr = _row_tile(rows, lane, itemsize)
    grid = (pl.cdiv(rows, tr),)

    out2d = pl.pallas_call(
        _identity_kernel,
        out_shape=jax.ShapeDtypeStruct((rows, lane), x2d.dtype),
        grid=grid,
        in_specs=[pl.BlockSpec((tr, lane), lambda i: (i, 0))],
        out_specs=pl.BlockSpec((tr, lane), lambda i: (i, 0)),
        input_output_aliases={0: 0},      # output reuses the input HBM buffer
        compiler_params=pltpu.CompilerParams(
            dimension_semantics=("parallel",),
            vmem_limit_bytes=32 * 1024 * 1024,
        ),
        cost_estimate=pl.CostEstimate(
            flops=0,
            transcendentals=0,
            bytes_accessed=2 * total * itemsize,
        ),
    )(x2d)

    return out2d.reshape(orig_shape)


# NOTE: the reference module's __init__ defines no parameters (feature_dim is
# unused), so there are no weights to initialize.

if __name__ == "__main__":
    key = jax.random.PRNGKey(0)
    # Small video-feature tensor: (B, C, H, W)
    x = jax.random.normal(key, (2, 4, 16, 16), dtype=jnp.float32)
    x_host = jax.device_get(x)           # keep a host copy: x itself is donated

    y = video_feature_encoder_forward(x)
    jax.block_until_ready(y)

    y_host = jax.device_get(y)
    assert y_host.shape == x_host.shape
    assert y_host.dtype == x_host.dtype
    assert (y_host == x_host).all()

    print("KERNEL_OK")
</pallas_src>

<mosaic_0001>
module attributes {stable_mosaic.version = 11 : i64} {
  func.func @_identity_kernel(%arg0: i32, %arg1: memref<1x2048xf32, #tpu.memory_space<vmem>>, %arg2: memref<1x2048xf32, #tpu.memory_space<vmem>>) attributes {dimension_semantics = [#tpu.dimension_semantics<parallel>], iteration_bounds = array<i64: 1>, scalar_prefetch = 0 : i64, scratch_operands = 0 : i64, tpu.core_type = #tpu.core_type<tc>, window_params = [{transform_indices = @transform_0, window_bounds = array<i64: 1, 2048>}, {transform_indices = @transform_1, window_bounds = array<i64: 1, 2048>}]} {
    %c0 = arith.constant 0 : index
    %c0_0 = arith.constant 0 : index
    %0 = vector.load %arg1[%c0, %c0_0] : memref<1x2048xf32, #tpu.memory_space<vmem>>, vector<1x2048xf32>
    %c0_1 = arith.constant 0 : index
    %c0_2 = arith.constant 0 : index
    %1 = vector.load %arg2[%c0_1, %c0_2] : memref<1x2048xf32, #tpu.memory_space<vmem>>, vector<1x2048xf32>
    tpu.vector_store %arg2[%c0_1, %c0_2], %0 {strides = array<i32>} : memref<1x2048xf32, #tpu.memory_space<vmem>>, vector<1x2048xf32>,
    return
  }
  func.func @transform_0(%arg0: i32) -> (i32, i32) {
    %c0_i32 = arith.constant 0 : i32
    %c0_i32_0 = arith.constant 0 : i32
    return %arg0, %c0_i32 : i32, i32
  }
  func.func @transform_1(%arg0: i32) -> (i32, i32) {
    %c0_i32 = arith.constant 0 : i32
    %c0_i32_0 = arith.constant 0 : i32
    return %arg0, %c0_i32 : i32, i32
  }
}

</mosaic_0001>

<llo_original>
// kernel: video_feature_encoder_forward.1
$region0: #{video_feature_encoder_forward.1}
  #allocation0 [shape = 'u32[]', space=smem, size = 0x4, offset = 0x4, fixed_abs, tag = 'smem constant byte address 0x4 - core index']
  #allocation1 [shape = 'u32[72,128]{1,0:T(1,128)}', space=vmem, size = 0x9000, scoped, tag = 'internal scratch']
  %s0 = inlined_call_operand.vmem [shape: f32[1,2048], index: 0, kind: input, shape index: {}, may-alias: {0,1}]
  %s1 = inlined_call_operand.vmem [shape: f32[1,2048], index: 1, kind: output, shape index: {}, may-alias: {0,1}]
  %s2 = sld [smem:[#allocation0]]
  $region14: #{video_feature_encoder_forward.1} parent=0
    _
  %s4 = ssub.s32 1, %s2
  %s5 = scalar_select 0, %s4, %s2
  // Predicated region
  $region2: #{video_feature_encoder_forward.1} parent=0 // pred_check
    _
  $region3: #{video_feature_encoder_forward.1} parent=0 // pred_check_branch
    %7 = sbr.rel (0) target = $region5
  $region4: #{video_feature_encoder_forward.1} parent=0 // pred_region
    _
  $region5: #{video_feature_encoder_forward.1} parent=0 // pred_fallthru
    _
  %v8 = vld [vmem:[%s0] sm:$0xff]
  %v9 = vld [vmem:[%s0 + $0x8] sm:$0xff]
  %10 = vst [vmem:[%s1] sm:$0xff] %v8
  %11 = vst [vmem:[%s1 + $0x8] sm:$0xff] %v9
  // Predicated region
  $region6: #{video_feature_encoder_forward.1} parent=0 // pred_check
    _
  $region7: #{video_feature_encoder_forward.1} parent=0 // pred_check_branch
    %13 = sbr.rel (0) target = $region9
  $region8: #{video_feature_encoder_forward.1} parent=0 // pred_region
    _
  $region9: #{video_feature_encoder_forward.1} parent=0 // pred_fallthru
    _
  // Predicated region
  $region10: #{video_feature_encoder_forward.1} parent=0 // pred_check
    _
  $region11: #{video_feature_encoder_forward.1} parent=0 // pred_check_branch
    %15 = sbr.rel (0) target = $region13
  $region12: #{video_feature_encoder_forward.1} parent=0 // pred_region
    _
  $region13: #{video_feature_encoder_forward.1} parent=0 // pred_fallthru
    _

</llo_original>
